<compile_context>
chip_gen: v5e
topology: v5e:2x2
jax: 0.10.0
libtpu: 0.0.40
codegen_flags: <defaults>
</compile_context>

<pallas_src>
import functools

import jax
import jax.numpy as jnp
from jax.experimental import pallas as pl
from jax.experimental.pallas import tpu as pltpu

_BN_EPS = 1e-5
_NUM_CLASSES = 2
_FC_NPAD = 128           # lane-dense padded classifier width
_VMEM_LIMIT = 48 * 1024 * 1024


def _round_up(x, m):
    return ((x + m - 1) // m) * m


# --------------------------- Pallas kernels ---------------------------------

def _mm_scale_bias_kernel(*refs, relu, has_residual):
    """out = act((A @ B) * scale + shift [+ residual]) ; epilogue in f32."""
    if has_residual:
        a_ref, b_ref, s_ref, c_ref, r_ref, o_ref = refs
    else:
        a_ref, b_ref, s_ref, c_ref, o_ref = refs
        r_ref = None
    acc = jnp.dot(a_ref[...], b_ref[...], preferred_element_type=jnp.float32)
    y = acc * s_ref[...] + c_ref[...]
    if r_ref is not None:
        y = y + r_ref[...].astype(jnp.float32)
    if relu:
        y = jnp.maximum(y, 0.0)
    o_ref[...] = y.astype(o_ref.dtype)


def matmul_scale_bias(a, b, scale, bias, relu=False, residual=None,
                      out_dtype=jnp.bfloat16):
    """out[m, n] = act((sum_k a[m,k]*b[k,n]) * scale[n] + bias[n] [+ res[m,n]]).

    a: (M, K) bf16, b: (K, N) bf16, scale/bias: (N,) f32, residual: (M, N) bf16.
    """
    M, K = a.shape
    _, N = b.shape
    if M >= 2048:
        TM = 256          # feed the 256x256 MXU on v6e/v7x when M is large
    elif M >= 128:
        TM = 128
    else:
        TM = _round_up(M, 8)
    grid = (pl.cdiv(M, TM),)

    in_specs = [
        pl.BlockSpec((TM, K), lambda i: (i, 0)),
        pl.BlockSpec((K, N), lambda i: (0, 0)),
        pl.BlockSpec((1, N), lambda i: (0, 0)),
        pl.BlockSpec((1, N), lambda i: (0, 0)),
    ]
    args = [a, b, scale.reshape(1, N), bias.reshape(1, N)]
    has_residual = residual is not None
    if has_residual:
        in_specs.append(pl.BlockSpec((TM, N), lambda i: (i, 0)))
        args.append(residual)

    return pl.pallas_call(
        functools.partial(_mm_scale_bias_kernel, relu=relu,
                          has_residual=has_residual),
        out_shape=jax.ShapeDtypeStruct((M, N), out_dtype),
        grid=grid,
        in_specs=in_specs,
        out_specs=pl.BlockSpec((TM, N), lambda i: (i, 0)),
        compiler_params=pltpu.CompilerParams(
            dimension_semantics=("parallel",),
            vmem_limit_bytes=_VMEM_LIMIT),
    )(*args)


def _maxpool9_kernel(*refs):
    o_ref = refs[-1]
    m = refs[0][...]
    for r in refs[1:-1]:
        m = jnp.maximum(m, r[...])
    o_ref[...] = m


def max_over_9_windows(wins, rows, C, dtype):
    """Element-wise max over 9 (rows, C) windows; tiled + pipelined over rows."""
    TR = min(1024, _round_up(rows, 8))
    spec = pl.BlockSpec((TR, C), lambda i: (i, 0))
    return pl.pallas_call(
        _maxpool9_kernel,
        out_shape=jax.ShapeDtypeStruct((rows, C), dtype),
        grid=(pl.cdiv(rows, TR),),
        in_specs=[spec] * 9,
        out_specs=spec,
        compiler_params=pltpu.CompilerParams(
            dimension_semantics=("parallel",),
            vmem_limit_bytes=_VMEM_LIMIT),
    )(*wins)


def _gap_fc_kernel(x_ref, w_ref, b_ref, o_ref):
    # mean over spatial positions in f32, then the classifier matmul (bf16 MXU,
    # f32 accumulate) fused in the same kernel.
    feats = jnp.mean(x_ref[...].astype(jnp.float32), axis=1)        # (B, C)
    logits = jnp.dot(feats.astype(jnp.bfloat16), w_ref[...],
                     preferred_element_type=jnp.float32) + b_ref[...]
    o_ref[...] = logits


def gap_fc(x, w_pad, b_pad):
    """x: (B, HW, C) bf16 -> logits (B, Npad) f32 (small; single block)."""
    B, HW, C = x.shape
    Np = w_pad.shape[1]
    return pl.pallas_call(
        _gap_fc_kernel,
        out_shape=jax.ShapeDtypeStruct((B, Np), jnp.float32),
    )(x, w_pad, b_pad)


# --------------------------- glue (layout / im2col) -------------------------

def conv_bn(x, prep, stride, pad, relu, residual=None):
    """x: NHWC bf16; prep: folded conv+BN params; conv has no bias."""
    B, H, W, Cin = x.shape
    kh, kw = prep["kh"], prep["kw"]
    Cout = prep["w2"].shape[1]
    kpad = prep["w2"].shape[0]
    Ho = (H + 2 * pad - kh) // stride + 1
    Wo = (W + 2 * pad - kw) // stride + 1
    xp = jnp.pad(x, ((0, 0), (pad, pad), (pad, pad), (0, 0))) if pad else x
    cols = []
    for ki in range(kh):
        for kj in range(kw):
            cols.append(xp[:, ki:ki + stride * Ho:stride,
                           kj:kj + stride * Wo:stride, :])
    k_true = kh * kw * Cin
    if kpad > k_true:   # lane-align K (weights were zero-padded to match)
        cols.append(jnp.zeros((B, Ho, Wo, kpad - k_true), x.dtype))
    patches = jnp.concatenate(cols, axis=-1).reshape(B * Ho * Wo, kpad)
    y = matmul_scale_bias(patches, prep["w2"], prep["scale"], prep["shift"],
                          relu=relu, residual=residual)
    return y.reshape(B, Ho, Wo, Cout)


def maxpool_3x3_s2(x):  # kernel 3, stride 2, pad 1 (implicit -inf padding)
    B, H, W, C = x.shape
    Ho = (H + 2 - 3) // 2 + 1
    Wo = (W + 2 - 3) // 2 + 1
    xp = jnp.pad(x, ((0, 0), (1, 1), (1, 1), (0, 0)),
                 constant_values=-jnp.inf)
    wins = [xp[:, ki:ki + 2 * Ho:2, kj:kj + 2 * Wo:2, :].reshape(B * Ho * Wo, C)
            for ki in range(3) for kj in range(3)]
    y = max_over_9_windows(wins, B * Ho * Wo, C, x.dtype)
    return y.reshape(B, Ho, Wo, C)


# --------------------------- parameters -------------------------------------

def _init_conv(key, cout, cin, k):
    fan_in = cin * k * k
    std = (2.0 / fan_in) ** 0.5
    return std * jax.random.normal(key, (cout, cin, k, k), jnp.float32)


def _init_bn(key, c):
    k1, k2, k3, k4 = jax.random.split(key, 4)
    gamma = 1.0 + 0.1 * jax.random.normal(k1, (c,), jnp.float32)
    beta = 0.1 * jax.random.normal(k2, (c,), jnp.float32)
    mean = 0.1 * jax.random.normal(k3, (c,), jnp.float32)
    var = 1.0 + 0.1 * jax.random.uniform(k4, (c,), jnp.float32)
    return (gamma, beta, mean, var)


def init_params(key):
    keys = iter(jax.random.split(key, 128))
    p = {}
    p["conv1_w"] = _init_conv(next(keys), 64, 3, 7)
    p["bn1"] = _init_bn(next(keys), 64)
    cfg = [(64, 1), (128, 2), (256, 2), (512, 2)]   # ResNet-18 stages
    cin = 64
    layers = []
    for cout, stride in cfg:
        blocks = []
        for bi in range(2):
            s = stride if bi == 0 else 1
            blk = {
                "conv1_w": _init_conv(next(keys), cout, cin if bi == 0 else cout, 3),
                "bn1": _init_bn(next(keys), cout),
                "conv2_w": _init_conv(next(keys), cout, cout, 3),
                "bn2": _init_bn(next(keys), cout),
                "stride": s,
            }
            if bi == 0 and (s != 1 or cin != cout):
                blk["down_w"] = _init_conv(next(keys), cout, cin, 1)
                blk["down_bn"] = _init_bn(next(keys), cout)
            blocks.append(blk)
        layers.append(blocks)
        cin = cout
    p["layers"] = layers
    # classifier: nn.Linear(512, 2)
    p["fc_w"] = 0.05 * jax.random.normal(next(keys), (2, 512), jnp.float32)
    p["fc_b"] = 0.05 * jax.random.normal(next(keys), (2,), jnp.float32)
    return p


def _fold_conv_bn(w, bn):
    """Fold eval-mode BN into per-channel scale/shift; reshape + K-pad + bf16."""
    gamma, beta, mean, var = bn
    scale = gamma / jnp.sqrt(var + _BN_EPS)
    shift = beta - mean * scale
    cout, cin, kh, kw = w.shape
    k_true = kh * kw * cin
    kpad = _round_up(k_true, 128)
    w2 = jnp.transpose(w, (2, 3, 1, 0)).reshape(k_true, cout)
    w2 = jnp.pad(w2, ((0, kpad - k_true), (0, 0))).astype(jnp.bfloat16)
    return {"w2": w2,
            "scale": scale.astype(jnp.float32),
            "shift": shift.astype(jnp.float32),
            "kh": int(kh), "kw": int(kw), "cin": int(cin)}


def prepare_params(raw):
    """One-time fold of the frozen backbone + classifier into kernel-ready form."""
    prep = {"conv1": _fold_conv_bn(raw["conv1_w"], raw["bn1"])}
    layers = []
    for blocks in raw["layers"]:
        pblocks = []
        for blk in blocks:
            pb = {"conv1": _fold_conv_bn(blk["conv1_w"], blk["bn1"]),
                  "conv2": _fold_conv_bn(blk["conv2_w"], blk["bn2"]),
                  "stride": blk["stride"]}
            if "down_w" in blk:
                pb["down"] = _fold_conv_bn(blk["down_w"], blk["down_bn"])
            pblocks.append(pb)
        layers.append(pblocks)
    prep["layers"] = layers
    # classifier weights padded to a lane-dense 128-wide output, bf16.
    wt = jnp.pad(raw["fc_w"].T, ((0, 0), (0, _FC_NPAD - _NUM_CLASSES)))
    prep["fc_w"] = wt.astype(jnp.bfloat16)                       # (512, 128)
    prep["fc_b"] = jnp.pad(raw["fc_b"],
                           (0, _FC_NPAD - _NUM_CLASSES)
                           ).astype(jnp.float32).reshape(1, _FC_NPAD)
    return prep


# --------------------------- model forward ----------------------------------

def basic_block(x, blk):
    if "down" in blk:
        identity = conv_bn(x, blk["down"], stride=blk["stride"], pad=0,
                           relu=False)
    else:
        identity = x
    out = conv_bn(x, blk["conv1"], stride=blk["stride"], pad=1, relu=True)
    B, H, W, C = out.shape
    # residual add + relu fused into conv2's matmul epilogue
    out = conv_bn(out, blk["conv2"], stride=1, pad=1, relu=True,
                  residual=identity.reshape(B * H * W, C))
    return out


def imagenet_transfer_forward(prep, x_nchw):
    # feature_extractor = ResNet-18 minus final fc, eval mode (frozen / no grad)
    x = jnp.transpose(x_nchw, (0, 2, 3, 1)).astype(jnp.bfloat16)   # NCHW -> NHWC
    x = conv_bn(x, prep["conv1"], stride=2, pad=3, relu=True)
    x = maxpool_3x3_s2(x)
    for blocks in prep["layers"]:
        for blk in blocks:
            x = basic_block(x, blk)
    B, H, W, C = x.shape
    # AdaptiveAvgPool2d(1) + flatten(1) + classifier, fused into one kernel.
    logits = gap_fc(x.reshape(B, H * W, C), prep["fc_w"], prep["fc_b"])
    return logits[:, :_NUM_CLASSES]


if __name__ == "__main__":
    key = jax.random.PRNGKey(0)
    pkey, xkey = jax.random.split(key)
    params = prepare_params(init_params(pkey))
    x = jax.random.normal(xkey, (2, 3, 32, 32), jnp.float32)  # NCHW like PyTorch
    out = imagenet_transfer_forward(params, x)
    out = jax.block_until_ready(out)
    assert out.shape == (2, 2) and out.dtype == jnp.float32
    print("KERNEL_OK")
</pallas_src>

<mosaic_0001>
module attributes {stable_mosaic.version = 11 : i64} {
  func.func @_mm_scale_bias_kernel(%arg0: i32, %arg1: memref<128x256xbf16, #tpu.memory_space<vmem>>, %arg2: memref<256x64xbf16, #tpu.memory_space<vmem>>, %arg3: memref<1x64xf32, #tpu.memory_space<vmem>>, %arg4: memref<1x64xf32, #tpu.memory_space<vmem>>, %arg5: memref<128x64xbf16, #tpu.memory_space<vmem>>) attributes {dimension_semantics = [#tpu.dimension_semantics<parallel>], iteration_bounds = array<i64: 4>, scalar_prefetch = 0 : i64, scratch_operands = 0 : i64, tpu.core_type = #tpu.core_type<tc>, window_params = [{transform_indices = @transform_0, window_bounds = array<i64: 128, 256>}, {pipeline_mode = #tpu.pipeline_mode<synchronous>, transform_indices = @transform_1, window_bounds = array<i64: 256, 64>}, {pipeline_mode = #tpu.pipeline_mode<synchronous>, transform_indices = @transform_2, window_bounds = array<i64: 1, 64>}, {pipeline_mode = #tpu.pipeline_mode<synchronous>, transform_indices = @transform_3, window_bounds = array<i64: 1, 64>}, {transform_indices = @transform_4, window_bounds = array<i64: 128, 64>}]} {
    %c0 = arith.constant 0 : index
    %c0_0 = arith.constant 0 : index
    %0 = vector.load %arg1[%c0, %c0_0] : memref<128x256xbf16, #tpu.memory_space<vmem>>, vector<128x256xbf16>
    %c0_1 = arith.constant 0 : index
    %c0_2 = arith.constant 0 : index
    %1 = vector.load %arg2[%c0_1, %c0_2] : memref<256x64xbf16, #tpu.memory_space<vmem>>, vector<256x64xbf16>
    %cst = arith.constant dense<0.000000e+00> : vector<128x64xf32>
    %2 = tpu.matmul %0, %1, %cst {dimension_numbers = #tpu.dot_dimension_numbers<[1], [0], [0], [1], [0, 0, 1, 1], [], []>} : vector<128x256xbf16>, vector<256x64xbf16>, vector<128x64xf32> -> vector<128x64xf32>
    %c0_3 = arith.constant 0 : index
    %c0_4 = arith.constant 0 : index
    %3 = vector.load %arg3[%c0_3, %c0_4] : memref<1x64xf32, #tpu.memory_space<vmem>>, vector<1x64xf32>
    %4 = vector.broadcast %3 : vector<1x64xf32> to vector<128x64xf32>
    %5 = arith.mulf %2, %4 : vector<128x64xf32>
    %c0_5 = arith.constant 0 : index
    %c0_6 = arith.constant 0 : index
    %6 = vector.load %arg4[%c0_5, %c0_6] : memref<1x64xf32, #tpu.memory_space<vmem>>, vector<1x64xf32>
    %7 = vector.broadcast %6 : vector<1x64xf32> to vector<128x64xf32>
    %8 = arith.addf %5, %7 : vector<128x64xf32>
    %cst_7 = arith.constant 0.000000e+00 : f32
    %9 = vector.broadcast %cst_7 : f32 to vector<128x64xf32>
    %10 = arith.maximumf %8, %9 : vector<128x64xf32>
    %11 = arith.truncf %10 : vector<128x64xf32> to vector<128x64xbf16>
    %c0_8 = arith.constant 0 : index
    %c0_9 = arith.constant 0 : index
    %12 = vector.load %arg5[%c0_8, %c0_9] : memref<128x64xbf16, #tpu.memory_space<vmem>>, vector<128x64xbf16>
    tpu.vector_store %arg5[%c0_8, %c0_9], %11 {strides = array<i32>} : memref<128x64xbf16, #tpu.memory_space<vmem>>, vector<128x64xbf16>,
    return
  }
  func.func @transform_0(%arg0: i32) -> (i32, i32) {
    %c0_i32 = arith.constant 0 : i32
    %c0_i32_0 = arith.constant 0 : i32
    return %arg0, %c0_i32 : i32, i32
  }
  func.func @transform_1(%arg0: i32) -> (i32, i32) {
    %c0_i32 = arith.constant 0 : i32
    %c0_i32_0 = arith.constant 0 : i32
    %c0_i32_1 = arith.constant 0 : i32
    return %c0_i32, %c0_i32_0 : i32, i32
  }
  func.func @transform_2(%arg0: i32) -> (i32, i32) {
    %c0_i32 = arith.constant 0 : i32
    %c0_i32_0 = arith.constant 0 : i32
    %c0_i32_1 = arith.constant 0 : i32
    return %c0_i32, %c0_i32_0 : i32, i32
  }
  func.func @transform_3(%arg0: i32) -> (i32, i32) {
    %c0_i32 = arith.constant 0 : i32
    %c0_i32_0 = arith.constant 0 : i32
    %c0_i32_1 = arith.constant 0 : i32
    return %c0_i32, %c0_i32_0 : i32, i32
  }
  func.func @transform_4(%arg0: i32) -> (i32, i32) {
    %c0_i32 = arith.constant 0 : i32
    %c0_i32_0 = arith.constant 0 : i32
    return %arg0, %c0_i32 : i32, i32
  }
}

</mosaic_0001>

<llo_original>
// kernel: tpu_custom_call.1
$region0: #{tpu_custom_call.1}
  #allocation0 [shape = 'u32[]', space=smem, size = 0x4, offset = 0x4, fixed_abs, tag = 'smem constant byte address 0x4 - core index']
  #allocation1 [shape = 'u32[72,128]{1,0:T(1,128)}', space=vmem, size = 0x9000, scoped, tag = 'internal scratch']
  %s0 = inlined_call_operand.hbm [shape: bf16[512,256], index: 0, kind: input, shape index: {}]
  %s1 = inlined_call_operand.vmem [shape: bf16[256,64], index: 1, kind: input, shape index: {}]
  %s2 = inlined_call_operand.vmem [shape: f32[1,64], index: 2, kind: input, shape index: {}]
  %s3 = inlined_call_operand.vmem [shape: f32[1,64], index: 3, kind: input, shape index: {}]
  %s4 = inlined_call_operand.vmem [shape: bf16[512,64], index: 4, kind: output, shape index: {}]
  %s5 = sld [smem:[#allocation0]]
  $region53: #{tpu_custom_call.1} parent=0
    _
  %s7 = ssub.s32 1, %s5
  %s8 = scalar_select 0, %s7, %s5
  $region1: #{tpu_custom_call.1} parent=0
    #allocation2 [shape = 'u8[131072]{0}', space=vmem, size = 0x20000, scoped, tag = 'input window, operand 0']
    #allocation3 [shape = 's32[2]{0}', space=sflag, size = 0x8, scoped, tag = 'scoped memory for tpu_custom_call.1']
    %9 = vsyncpa [#allocation3], 0
    %s10 = scalar_lea.sflag [#allocation3], 1
    %11 = vsyncpa %s10, 0
    loop: start=0, step=1, limit=6
    $region2: #{tpu_custom_call.1} parent=1 // loop_pre_header
      _
    $region3: #{tpu_custom_call.1} parent=1 // loop_header
      %s13 = sphi 0, %s17
      %p14 = scmp.ge.s32.totalorder %s13, 6
      %s23 = sphi 0, %s25
      %s26 = sphi 0, %s23
      %s27 = sphi 0, %s26
      %s43 = sphi 0, %s27
      %s47 = sphi 0, %s47
      %s49 = sphi 0, %s47
      %s50 = sphi 0, %s49
      %s64 = sphi 0, %s50
      %s68 = sphi 0, %s68
      %s70 = sphi 0, %s68
      %s71 = sphi 0, %s70
      %s85 = sphi 0, %s71
      %s89 = sphi 0, %s89
      %s91 = sphi 0, %s89
      %s92 = sphi 0, %s91
      %s106 = sphi 0, %s92
      %s112 = sphi 0, %s114
      %s115 = sphi 0, %s112
      %s116 = sphi 0, %s115
      %s132 = sphi 0, %s116
    $region4: #{tpu_custom_call.1} parent=1 // loop_header_branch
      %16 = sbr.rel (%p14) target = $region8
    $region5: #{tpu_custom_call.1} parent=1 // loop_body
      %s18 = ssub.s32 %s13, 1
      %s19 = ssub.s32 %s13, 2
      %s20 = sadd.s32 %s13, 1
      %s21 = ssub.s32 %s13, %s20
      %p22 = scmp.eq.s32.totalorder %s21, 0
      %s24 = sadd.s32 %s23, 1
      %s25 = scalar_select %p22, %s23, %s24
      %p28 = pneg %p22
      %p29 = scmp.eq.s32.totalorder %s13, 3
      %p30 = por %p28, %p29
      %p31 = scmp.ne.s32.totalorder %s23, %s26
      %p32 = scmp.eq.s32.totalorder %s13, 0
      %p33 = por %p31, %p32
      %p34 = scmp.ne.s32.totalorder %s23, %s26
      %p35 = scmp.eq.s32.totalorder %s18, 3
      %p36 = por %p34, %p35
      %p37 = scmp.ne.s32.totalorder %s26, %s27
      %p38 = scmp.eq.s32.totalorder %s18, 0
      %p39 = por %p37, %p38
      %p40 = scmp.ne.s32.totalorder %s26, %s27
      %p41 = scmp.eq.s32.totalorder %s19, 3
      %p42 = por %p40, %p41
      %p44 = scmp.ne.s32.totalorder %s27, %s43
      %p45 = scmp.eq.s32.totalorder %s19, 0
      %p46 = por %p44, %p45
      %s48 = sadd.s32 %s47, 1
      %p51 = scmp.eq.s32.totalorder %s13, 3
      %p52 = scmp.ne.s32.totalorder %s47, %s49
      %p53 = scmp.eq.s32.totalorder %s13, 0
      %p54 = por %p52, %p53
      %p55 = scmp.ne.s32.totalorder %s47, %s49
      %p56 = scmp.eq.s32.totalorder %s18, 3
      %p57 = por %p55, %p56
      %p58 = scmp.ne.s32.totalorder %s49, %s50
      %p59 = scmp.eq.s32.totalorder %s18, 0
      %p60 = por %p58, %p59
      %p61 = scmp.ne.s32.totalorder %s49, %s50
      %p62 = scmp.eq.s32.totalorder %s19, 3
      %p63 = por %p61, %p62
      %p65 = scmp.ne.s32.totalorder %s50, %s64
      %p66 = scmp.eq.s32.totalorder %s19, 0
      %p67 = por %p65, %p66
      %s69 = sadd.s32 %s68, 1
      %p72 = scmp.eq.s32.totalorder %s13, 3
      %p73 = scmp.ne.s32.totalorder %s68, %s70
      %p74 = scmp.eq.s32.totalorder %s13, 0
      %p75 = por %p73, %p74
      %p76 = scmp.ne.s32.totalorder %s68, %s70
      %p77 = scmp.eq.s32.totalorder %s18, 3
      %p78 = por %p76, %p77
      %p79 = scmp.ne.s32.totalorder %s70, %s71
      %p80 = scmp.eq.s32.totalorder %s18, 0
      %p81 = por %p79, %p80
      %p82 = scmp.ne.s32.totalorder %s70, %s71
      %p83 = scmp.eq.s32.totalorder %s19, 3
      %p84 = por %p82, %p83
      %p86 = scmp.ne.s32.totalorder %s71, %s85
      %p87 = scmp.eq.s32.totalorder %s19, 0
      %p88 = por %p86, %p87
      %s90 = sadd.s32 %s89, 1
      %p93 = scmp.eq.s32.totalorder %s13, 3
      %p94 = scmp.ne.s32.totalorder %s89, %s91
      %p95 = scmp.eq.s32.totalorder %s13, 0
      %p96 = por %p94, %p95
      %p97 = scmp.ne.s32.totalorder %s89, %s91
      %p98 = scmp.eq.s32.totalorder %s18, 3
      %p99 = por %p97, %p98
      %p100 = scmp.ne.s32.totalorder %s91, %s92
      %p101 = scmp.eq.s32.totalorder %s18, 0
      %p102 = por %p100, %p101
      %p103 = scmp.ne.s32.totalorder %s91, %s92
      %p104 = scmp.eq.s32.totalorder %s19, 3
      %p105 = por %p103, %p104
      %p107 = scmp.ne.s32.totalorder %s92, %s106
      %p108 = scmp.eq.s32.totalorder %s19, 0
      %p109 = por %p107, %p108
      %s110 = ssub.s32 %s13, %s20
      %p111 = scmp.eq.s32.totalorder %s110, 0
      %s113 = sadd.s32 %s112, 1
      %s114 = scalar_select %p111, %s112, %s113
      %p117 = pneg %p111
      %p118 = scmp.eq.s32.totalorder %s13, 3
      %p119 = por %p117, %p118
      %p120 = scmp.ne.s32.totalorder %s112, %s115
      %p121 = scmp.eq.s32.totalorder %s13, 0
      %p122 = por %p120, %p121
      %p123 = scmp.ne.s32.totalorder %s112, %s115
      %p124 = scmp.eq.s32.totalorder %s18, 3
      %p125 = por %p123, %p124
      %p126 = scmp.ne.s32.totalorder %s115, %s116
      %p127 = scmp.eq.s32.totalorder %s18, 0
      %p128 = por %p126, %p127
      %p129 = scmp.ne.s32.totalorder %s115, %s116
      %p130 = scmp.eq.s32.totalorder %s19, 3
      %p131 = por %p129, %p130
      %p133 = scmp.ne.s32.totalorder %s116, %s132
      %p134 = scmp.eq.s32.totalorder %s19, 0
      %p135 = por %p133, %p134
      %p136 = scmp.le.s32.totalorder 1, %s13
      %p137 = scmp.lt.s32.totalorder %s13, 5
      %p138 = pnand %p136, %p137
      %p139 = pneg %p138
      // Predicated region
      $region9: #{tpu_custom_call.1} parent=5 // pred_check
        _
      $region10: #{tpu_custom_call.1} parent=5 // pred_check_branch
        %141 = sbr.rel (%p138) target = $region12
      $region11: #{tpu_custom_call.1} parent=5 // pred_region
        %s142 = ssub.s32 %s13, 1
        // Predicated region
        $region13: #{tpu_custom_call.1} parent=11 // pred_check
          %p143 = pneg %p60
        $region14: #{tpu_custom_call.1} parent=11 // pred_check_branch
          %145 = sbr.rel (%p143) target = $region16
        $region15: #{tpu_custom_call.1} parent=11 // pred_region
          _
        $region16: #{tpu_custom_call.1} parent=11 // pred_fallthru
          _
        // Predicated region
        $region17: #{tpu_custom_call.1} parent=11 // pred_check
          %p146 = pneg %p81
        $region18: #{tpu_custom_call.1} parent=11 // pred_check_branch
          %148 = sbr.rel (%p146) target = $region20
        $region19: #{tpu_custom_call.1} parent=11 // pred_region
          _
        $region20: #{tpu_custom_call.1} parent=11 // pred_fallthru
          _
        // Predicated region
        $region21: #{tpu_custom_call.1} parent=11 // pred_check
          %p149 = pneg %p102
        $region22: #{tpu_custom_call.1} parent=11 // pred_check_branch
          %151 = sbr.rel (%p149) target = $region24
        $region23: #{tpu_custom_call.1} parent=11 // pred_region
          _
        $region24: #{tpu_custom_call.1} parent=11 // pred_fallthru
          _
      $region12: #{tpu_custom_call.1} parent=5 // pred_fallthru
        _
      %p152 = scmp.lt.s32.totalorder %s13, 4
      // Predicated region
      $region25: #{tpu_custom_call.1} parent=5 // pred_check
        %p153 = pneg %p152
      $region26: #{tpu_custom_call.1} parent=5 // pred_check_branch
        %155 = sbr.rel (%p153) target = $region28
      $region27: #{tpu_custom_call.1} parent=5 // pred_region
        // Predicated region
        $region29: #{tpu_custom_call.1} parent=27 // pred_check
          %p156 = pneg %p33
        $region30: #{tpu_custom_call.1} parent=27 // pred_check_branch
          %158 = sbr.rel (%p156) target = $region32
        $region31: #{tpu_custom_call.1} parent=27 // pred_region
          %s159 = sand.u32 %s23, 1
          %s160 = scalar_lea.sflag [#allocation3], %s159
          %s161 = sand.u32 %s23, 1
          %s162 = smul.addr %s161, 128
          %s163 = scalar_lea.vmem [#allocation2], %s162
          %s164 = smul.u32 16, %s13
          %166 = vsyncadd %s160, 0
          %s167 = smul.addr %s164, 2
          %s168 = smul.addr %s167, 4
          %s169 = scalar_lea.hbm %s0, %s168
          %s170 = sshll.u32 %s169, 4
          %s171 = int_to_ptr.hbm [resolvable:$true] %s170
          %s172 = sshll.u32 %s163, 4
          %s173 = int_to_ptr.vmem [resolvable:$true] %s172
          %178 = dma.hbm_to_vmem [thread:$0]  %s171, 2048, %s173, %s160, 128, 128, 8
        $region32: #{tpu_custom_call.1} parent=27 // pred_fallthru
          _
      $region28: #{tpu_custom_call.1} parent=5 // pred_fallthru
        _
      %p179 = scmp.le.s32.totalorder 1, %s13
      %p180 = scmp.lt.s32.totalorder %s13, 5
      %p181 = pnand %p179, %p180
      %p182 = pneg %p181
      // Predicated region
      $region33: #{tpu_custom_call.1} parent=5 // pred_check
        _
      $region34: #{tpu_custom_call.1} parent=5 // pred_check_branch
        %184 = sbr.rel (%p181) target = $region36
      $region35: #{tpu_custom_call.1} parent=5 // pred_region
        %s185 = ssub.s32 %s13, 1
        %s186 = sand.u32 %s26, 1
        %s187 = scalar_lea.sflag [#allocation3], %s186
        %s188 = sand.u32 %s26, 1
        %s189 = smul.addr %s188, 128
        %s190 = scalar_lea.vmem [#allocation2], %s189
        // Predicated region
        $region37: #{tpu_custom_call.1} parent=35 // pred_check
          %p191 = pneg %p39
        $region38: #{tpu_custom_call.1} parent=35 // pred_check_branch
          %193 = sbr.rel (%p191) target = $region40
        $region39: #{tpu_custom_call.1} parent=35 // pred_region
          %195 = dma.done %s187, 2048
        $region40: #{tpu_custom_call.1} parent=35 // pred_fallthru
          _
        %s196 = sand.u32 %s26, 1
        %s197 = scalar_lea.sflag [#allocation3], %s196
        %s198 = sand.u32 %s26, 1
        %s199 = smul.addr %s198, 128
        %s200 = scalar_lea.vmem [#allocation2], %s199
        %p201 = pneg %p39
        %p202 = pneg %p36
        %p203 = pneg %p60
        %p204 = pneg %p57
        %p205 = pneg %p81
        %p206 = pneg %p78
        %p207 = pneg %p102
        %p208 = pneg %p99
        %p209 = pneg %p128
        %p210 = pneg %p125
        %s211 = smul.u32 16, %s18
        %p212 = scmp.lt.s32.totalorder %s211, 63
        %s213 = scalar_select %p212, %s211, 63
        %s214 = smul.addr %s213, 4
        %s215 = scalar_lea.vmem %s4, %s214
        %s216 = smul.u32 16, %s18
        %s217 = smul.u32 16, %s18
        %p218 = scmp.lt.s32.totalorder %s217, 63
        %s219 = scalar_select %p218, %s217, 63
        %s220 = smul.addr %s219, 4
        %s221 = scalar_lea.vmem %s4, %s220
        %s222 = smul.u32 16, %s18
        %v223 = vld [vmem:[%s190] sm:$0xff]
        %v224 = vld [vmem:[%s190 + $0x8] sm:$0xff]
        %v225 = vld [vmem:[%s190 + $0x10] sm:$0xff]
        %v226 = vld [vmem:[%s190 + $0x18] sm:$0xff]
        %v227 = vld [vmem:[%s190 + $0x20] sm:$0xff]
        %v228 = vld [vmem:[%s190 + $0x28] sm:$0xff]
        %v229 = vld [vmem:[%s190 + $0x30] sm:$0xff]
        %v230 = vld [vmem:[%s190 + $0x38] sm:$0xff]
        %v231 = vld [vmem:[%s190 + $0x40] sm:$0xff]
        %v232 = vld [vmem:[%s190 + $0x48] sm:$0xff]
        %v233 = vld [vmem:[%s190 + $0x50] sm:$0xff]
        %v234 = vld [vmem:[%s190 + $0x58] sm:$0xff]
        %v235 = vld [vmem:[%s190 + $0x60] sm:$0xff]
        %v236 = vld [vmem:[%s190 + $0x68] sm:$0xff]
        %v237 = vld [vmem:[%s190 + $0x70] sm:$0xff]
        %v238 = vld [vmem:[%s190 + $0x78] sm:$0xff]
        %v239 = vld [vmem:[%s1] sm:$0xf]
        %v240 = vld [vmem:[%s1 + $0x4] sm:$0xf]
        %v241 = vld [vmem:[%s1 + $0x8] sm:$0xf]
        %v242 = vld [vmem:[%s1 + $0xc] sm:$0xf]
        %v243 = vld [vmem:[%s1 + $0x10] sm:$0xf]
        %v244 = vld [vmem:[%s1 + $0x14] sm:$0xf]
        %v245 = vld [vmem:[%s1 + $0x18] sm:$0xf]
        %v246 = vld [vmem:[%s1 + $0x1c] sm:$0xf]
        %v247 = vld [vmem:[%s1 + $0x20] sm:$0xf]
        %v248 = vld [vmem:[%s1 + $0x24] sm:$0xf]
        %v249 = vld [vmem:[%s1 + $0x28] sm:$0xf]
        %v250 = vld [vmem:[%s1 + $0x2c] sm:$0xf]
        %v251 = vld [vmem:[%s1 + $0x30] sm:$0xf]
        %v252 = vld [vmem:[%s1 + $0x34] sm:$0xf]
        %v253 = vld [vmem:[%s1 + $0x38] sm:$0xf]
        %v254 = vld [vmem:[%s1 + $0x3c] sm:$0xf]
        %v255 = vld [vmem:[%s1 + $0x40] sm:$0xf]
        %v256 = vld [vmem:[%s1 + $0x44] sm:$0xf]
        %v257 = vld [vmem:[%s1 + $0x48] sm:$0xf]
        %v258 = vld [vmem:[%s1 + $0x4c] sm:$0xf]
        %v259 = vld [vmem:[%s1 + $0x50] sm:$0xf]
        %v260 = vld [vmem:[%s1 + $0x54] sm:$0xf]
        %v261 = vld [vmem:[%s1 + $0x58] sm:$0xf]
        %v262 = vld [vmem:[%s1 + $0x5c] sm:$0xf]
        %v263 = vld [vmem:[%s1 + $0x60] sm:$0xf]
        %v264 = vld [vmem:[%s1 + $0x64] sm:$0xf]
        %v265 = vld [vmem:[%s1 + $0x68] sm:$0xf]
        %v266 = vld [vmem:[%s1 + $0x6c] sm:$0xf]
        %v267 = vld [vmem:[%s1 + $0x70] sm:$0xf]
        %v268 = vld [vmem:[%s1 + $0x74] sm:$0xf]
        %v269 = vld [vmem:[%s1 + $0x78] sm:$0xf]
        %v270 = vld [vmem:[%s1 + $0x7c] sm:$0xf]
        %v287 = vunpack.c.l.b16 %v223
        %v288 = vunpack.c.h.b16 %v223
        %v289 = vunpack.c.l.b16 %v224
        %v290 = vunpack.c.h.b16 %v224
        %v291 = vunpack.c.l.b16 %v225
        %v292 = vunpack.c.h.b16 %v225
        %v293 = vunpack.c.l.b16 %v226
        %v294 = vunpack.c.h.b16 %v226
        %v295 = vunpack.c.l.b16 %v227
        %v296 = vunpack.c.h.b16 %v227
        %v297 = vunpack.c.l.b16 %v228
        %v298 = vunpack.c.h.b16 %v228
        %v299 = vunpack.c.l.b16 %v229
        %v300 = vunpack.c.h.b16 %v229
        %v301 = vunpack.c.l.b16 %v230
        %v302 = vunpack.c.h.b16 %v230
        %v303 = vunpack.c.l.b16 %v231
        %v304 = vunpack.c.h.b16 %v231
        %v305 = vunpack.c.l.b16 %v232
        %v306 = vunpack.c.h.b16 %v232
        %v307 = vunpack.c.l.b16 %v233
        %v308 = vunpack.c.h.b16 %v233
        %v309 = vunpack.c.l.b16 %v234
        %v310 = vunpack.c.h.b16 %v234
        %v311 = vunpack.c.l.b16 %v235
        %v312 = vunpack.c.h.b16 %v235
        %v313 = vunpack.c.l.b16 %v236
        %v314 = vunpack.c.h.b16 %v236
        %v315 = vunpack.c.l.b16 %v237
        %v316 = vunpack.c.h.b16 %v237
        %v317 = vunpack.c.l.b16 %v238
        %v318 = vunpack.c.h.b16 %v238
        %v319 = vpack.c.b16 %v289, %v287
        %v320 = vpack.c.b16 %v290, %v288
        %v321 = vpack.c.b16 %v293, %v291
        %v322 = vpack.c.b16 %v294, %v292
        %v323 = vpack.c.b16 %v297, %v295
        %v324 = vpack.c.b16 %v298, %v296
        %v325 = vpack.c.b16 %v301, %v299
        %v326 = vpack.c.b16 %v302, %v300
        %v327 = vpack.c.b16 %v305, %v303
        %v328 = vpack.c.b16 %v306, %v304
        %v329 = vpack.c.b16 %v309, %v307
        %v330 = vpack.c.b16 %v310, %v308
        %v331 = vpack.c.b16 %v313, %v311
        %v332 = vpack.c.b16 %v314, %v312
        %v333 = vpack.c.b16 %v317, %v315
        %v334 = vpack.c.b16 %v318, %v316
        %v383 = vunpack.c.l.b16 %v239
        %v384 = vunpack.c.l.b16 %v240
        %v385 = vunpack.c.l.b16 %v241
        %v386 = vunpack.c.l.b16 %v242
        %v387 = vunpack.c.l.b16 %v243
        %v388 = vunpack.c.l.b16 %v244
        %v389 = vunpack.c.l.b16 %v245
        %v390 = vunpack.c.l.b16 %v246
        %v391 = vunpack.c.l.b16 %v247
        %v392 = vunpack.c.l.b16 %v248
        %v393 = vunpack.c.l.b16 %v249
        %v394 = vunpack.c.l.b16 %v250
        %v395 = vunpack.c.l.b16 %v251
        %v396 = vunpack.c.l.b16 %v252
        %v397 = vunpack.c.l.b16 %v253
        %v398 = vunpack.c.l.b16 %v254
        %v399 = vunpack.c.l.b16 %v255
        %v400 = vunpack.c.l.b16 %v256
        %v401 = vunpack.c.l.b16 %v257
        %v402 = vunpack.c.l.b16 %v258
        %v403 = vunpack.c.l.b16 %v259
        %v404 = vunpack.c.l.b16 %v260
        %v405 = vunpack.c.l.b16 %v261
        %v406 = vunpack.c.l.b16 %v262
        %v407 = vunpack.c.l.b16 %v263
        %v408 = vunpack.c.l.b16 %v264
        %v409 = vunpack.c.l.b16 %v265
        %v410 = vunpack.c.l.b16 %v266
        %v411 = vunpack.c.l.b16 %v267
        %v412 = vunpack.c.l.b16 %v268
        %v413 = vunpack.c.l.b16 %v269
        %v414 = vunpack.c.l.b16 %v270
        %v415 = vpack.c.b16 %v384, %v383
        %v416 = vpack.c.b16 %v386, %v385
        %v417 = vpack.c.b16 %v388, %v387
        %v418 = vpack.c.b16 %v390, %v389
        %v419 = vpack.c.b16 %v392, %v391
        %v420 = vpack.c.b16 %v394, %v393
        %v421 = vpack.c.b16 %v396, %v395
        %v422 = vpack.c.b16 %v398, %v397
        %v423 = vpack.c.b16 %v400, %v399
        %v424 = vpack.c.b16 %v402, %v401
        %v425 = vpack.c.b16 %v404, %v403
        %v426 = vpack.c.b16 %v406, %v405
        %v427 = vpack.c.b16 %v408, %v407
        %v428 = vpack.c.b16 %v410, %v409
        %v429 = vpack.c.b16 %v412, %v411
        %v430 = vpack.c.b16 %v414, %v413
        %447 = vmatpush.bf16.msra.mxu0 %v422
        %448 = vmatpush.bf16.msra.mxu0 %v421
        %449 = vmatpush.bf16.msra.mxu0 %v420
        %450 = vmatpush.bf16.msra.mxu0 %v419
        %451 = vmatpush.bf16.msra.mxu0 %v418
        %452 = vmatpush.bf16.msra.mxu0 %v417
        %453 = vmatpush.bf16.msra.mxu0 %v416
        %454 = vmatpush.bf16.msra.mxu0 %v415
        %455 = vmatmul.bf16.gmra.mxu0 %v319
        %v456 = vpop.f32.mrf.mxu0
        %v457 = vadd.f32 0.0, %v456
        %v458 = vpop.f32.mrf.mxu0
        %v459 = vadd.f32 0.0, %v458
        %460 = vmatmul.bf16.gmra.mxu0 %v321
        %v461 = vpop.f32.mrf.mxu0
        %v462 = vadd.f32 0.0, %v461
        %v463 = vpop.f32.mrf.mxu0
        %v464 = vadd.f32 0.0, %v463
        %465 = vmatmul.bf16.gmra.mxu0 %v323
        %v466 = vpop.f32.mrf.mxu0
        %v467 = vadd.f32 0.0, %v466
        %v468 = vpop.f32.mrf.mxu0
        %v469 = vadd.f32 0.0, %v468
        %470 = vmatmul.bf16.gmra.mxu0 %v325
        %v471 = vpop.f32.mrf.mxu0
        %v472 = vadd.f32 0.0, %v471
        %v473 = vpop.f32.mrf.mxu0
        %v474 = vadd.f32 0.0, %v473
        %475 = vmatmul.bf16.gmra.mxu0 %v327
        %v476 = vpop.f32.mrf.mxu0
        %v477 = vadd.f32 0.0, %v476
        %v478 = vpop.f32.mrf.mxu0
        %v479 = vadd.f32 0.0, %v478
        %480 = vmatmul.bf16.gmra.mxu0 %v329
        %v481 = vpop.f32.mrf.mxu0
        %v482 = vadd.f32 0.0, %v481
        %v483 = vpop.f32.mrf.mxu0
        %v484 = vadd.f32 0.0, %v483
        %485 = vmatmul.bf16.gmra.mxu0 %v331
        %v486 = vpop.f32.mrf.mxu0
        %v487 = vadd.f32 0.0, %v486
        %v488 = vpop.f32.mrf.mxu0
        %v489 = vadd.f32 0.0, %v488
        %490 = vmatmul.bf16.gmra.mxu0 %v333
        %v491 = vpop.f32.mrf.mxu0
        %v492 = vadd.f32 0.0, %v491
        %v493 = vpop.f32.mrf.mxu0
        %v494 = vadd.f32 0.0, %v493
        %495 = vdwg.mxu0
        %496 = vmatpush.bf16.msra.mxu0 %v430
        %497 = vmatpush.bf16.msra.mxu0 %v429
        %498 = vmatpush.bf16.msra.mxu0 %v428
        %499 = vmatpush.bf16.msra.mxu0 %v427
        %500 = vmatpush.bf16.msra.mxu0 %v426
        %501 = vmatpush.bf16.msra.mxu0 %v425
        %502 = vmatpush.bf16.msra.mxu0 %v424
        %503 = vmatpush.bf16.msra.mxu0 %v423
        %504 = vmatmul.bf16.gmra.mxu0 %v320
        %v505 = vpop.f32.mrf.mxu0
        %v506 = vadd.f32 %v457, %v505
        %v507 = vpop.f32.mrf.mxu0
        %v508 = vadd.f32 %v459, %v507
        %509 = vmatmul.bf16.gmra.mxu0 %v322
        %v510 = vpop.f32.mrf.mxu0
        %v511 = vadd.f32 %v462, %v510
        %v512 = vpop.f32.mrf.mxu0
        %v513 = vadd.f32 %v464, %v512
        %514 = vmatmul.bf16.gmra.mxu0 %v324
        %v515 = vpop.f32.mrf.mxu0
        %v516 = vadd.f32 %v467, %v515
        %v517 = vpop.f32.mrf.mxu0
        %v518 = vadd.f32 %v469, %v517
        %519 = vmatmul.bf16.gmra.mxu0 %v326
        %v520 = vpop.f32.mrf.mxu0
        %v521 = vadd.f32 %v472, %v520
        %v522 = vpop.f32.mrf.mxu0
        %v523 = vadd.f32 %v474, %v522
        %524 = vmatmul.bf16.gmra.mxu0 %v328
        %v525 = vpop.f32.mrf.mxu0
        %v526 = vadd.f32 %v477, %v525
        %v527 = vpop.f32.mrf.mxu0
        %v528 = vadd.f32 %v479, %v527
        %529 = vmatmul.bf16.gmra.mxu0 %v330
        %v530 = vpop.f32.mrf.mxu0
        %v531 = vadd.f32 %v482, %v530
        %v532 = vpop.f32.mrf.mxu0
        %v533 = vadd.f32 %v484, %v532
        %534 = vmatmul.bf16.gmra.mxu0 %v332
        %v535 = vpop.f32.mrf.mxu0
        %v536 = vadd.f32 %v487, %v535
        %v537 = vpop.f32.mrf.mxu0
        %v538 = vadd.f32 %v489, %v537
        %539 = vmatmul.bf16.gmra.mxu0 %v334
        %v540 = vpop.f32.mrf.mxu0
        %v541 = vadd.f32 %v492, %v540
        %v542 = vpop.f32.mrf.mxu0
        %v543 = vadd.f32 %v494, %v542
        %544 = vdwg.mxu0
        %v545 = vld [vmem:[%s2] sm:$0x1]
        %v547 = vperm.slane %v545, 0
        %v549 = vmul.f32 %v506, %v547
        %v550 = vmul.f32 %v508, %v547
        %v551 = vmul.f32 %v511, %v547
        %v552 = vmul.f32 %v513, %v547
        %v553 = vmul.f32 %v516, %v547
        %v554 = vmul.f32 %v518, %v547
        %v555 = vmul.f32 %v521, %v547
        %v556 = vmul.f32 %v523, %v547
        %v557 = vmul.f32 %v526, %v547
        %v558 = vmul.f32 %v528, %v547
        %v559 = vmul.f32 %v531, %v547
        %v560 = vmul.f32 %v533, %v547
        %v561 = vmul.f32 %v536, %v547
        %v562 = vmul.f32 %v538, %v547
        %v563 = vmul.f32 %v541, %v547
        %v564 = vmul.f32 %v543, %v547
        %v565 = vld [vmem:[%s3] sm:$0x1]
        %v567 = vperm.slane %v565, 0
        %v569 = vadd.f32 %v549, %v567
        %v570 = vadd.f32 %v550, %v567
        %v571 = vadd.f32 %v551, %v567
        %v572 = vadd.f32 %v552, %v567
        %v573 = vadd.f32 %v553, %v567
        %v574 = vadd.f32 %v554, %v567
        %v575 = vadd.f32 %v555, %v567
        %v576 = vadd.f32 %v556, %v567
        %v577 = vadd.f32 %v557, %v567
        %v578 = vadd.f32 %v558, %v567
        %v579 = vadd.f32 %v559, %v567
        %v580 = vadd.f32 %v560, %v567
        %v581 = vadd.f32 %v561, %v567
        %v582 = vadd.f32 %v562, %v567
        %v583 = vadd.f32 %v563, %v567
        %v584 = vadd.f32 %v564, %v567
        %v585 = vmax.f32 %v569, 0.0
        %v586 = vmax.f32 %v570, 0.0
        %v587 = vmax.f32 %v571, 0.0
        %v588 = vmax.f32 %v572, 0.0
        %v589 = vmax.f32 %v573, 0.0
        %v590 = vmax.f32 %v574, 0.0
        %v591 = vmax.f32 %v575, 0.0
        %v592 = vmax.f32 %v576, 0.0
        %v593 = vmax.f32 %v577, 0.0
        %v594 = vmax.f32 %v578, 0.0
        %v595 = vmax.f32 %v579, 0.0
        %v596 = vmax.f32 %v580, 0.0
        %v597 = vmax.f32 %v581, 0.0
        %v598 = vmax.f32 %v582, 0.0
        %v599 = vmax.f32 %v583, 0.0
        %v600 = vmax.f32 %v584, 0.0
        %v601 = vpack.c.bf16 %v585, %v585
        %v602 = vpack.c.bf16 %v586, %v586
        %v603 = vpack.c.bf16 %v587, %v587
        %v604 = vpack.c.bf16 %v588, %v588
        %v605 = vpack.c.bf16 %v589, %v589
        %v606 = vpack.c.bf16 %v590, %v590
        %v607 = vpack.c.bf16 %v591, %v591
        %v608 = vpack.c.bf16 %v592, %v592
        %v609 = vpack.c.bf16 %v593, %v593
        %v610 = vpack.c.bf16 %v594, %v594
        %v611 = vpack.c.bf16 %v595, %v595
        %v612 = vpack.c.bf16 %v596, %v596
        %v613 = vpack.c.bf16 %v597, %v597
        %v614 = vpack.c.bf16 %v598, %v598
        %v615 = vpack.c.bf16 %v599, %v599
        %v616 = vpack.c.bf16 %v600, %v600
        %vm617 = vcmask 519168
        %618 = vst.msk [vmem:[%s221] sm:$0xf] %vm617, %v601
        %619 = vst.msk [vmem:[%s221 + $0x4] sm:$0xf] %vm617, %v602
        %620 = vst.msk [vmem:[%s221 + $0x8] sm:$0xf] %vm617, %v603
        %621 = vst.msk [vmem:[%s221 + $0xc] sm:$0xf] %vm617, %v604
        %622 = vst.msk [vmem:[%s221 + $0x10] sm:$0xf] %vm617, %v605
        %623 = vst.msk [vmem:[%s221 + $0x14] sm:$0xf] %vm617, %v606
        %624 = vst.msk [vmem:[%s221 + $0x18] sm:$0xf] %vm617, %v607
        %625 = vst.msk [vmem:[%s221 + $0x1c] sm:$0xf] %vm617, %v608
        %626 = vst.msk [vmem:[%s221 + $0x20] sm:$0xf] %vm617, %v609
        %627 = vst.msk [vmem:[%s221 + $0x24] sm:$0xf] %vm617, %v610
        %628 = vst.msk [vmem:[%s221 + $0x28] sm:$0xf] %vm617, %v611
        %629 = vst.msk [vmem:[%s221 + $0x2c] sm:$0xf] %vm617, %v612
        %630 = vst.msk [vmem:[%s221 + $0x30] sm:$0xf] %vm617, %v613
        %631 = vst.msk [vmem:[%s221 + $0x34] sm:$0xf] %vm617, %v614
        %632 = vst.msk [vmem:[%s221 + $0x38] sm:$0xf] %vm617, %v615
        %633 = vst.msk [vmem:[%s221 + $0x3c] sm:$0xf] %vm617, %v616
        %s634 = smul.u32 16, %s18
        %p635 = scmp.lt.s32.totalorder %s634, 63
        %s636 = scalar_select %p635, %s634, 63
        %s637 = smul.addr %s636, 4
        %s638 = scalar_lea.vmem %s4, %s637
        // Predicated region
        $region41: #{tpu_custom_call.1} parent=35 // pred_check
          %p639 = pneg %p125
        $region42: #{tpu_custom_call.1} parent=35 // pred_check_branch
          %641 = sbr.rel (%p639) target = $region44
        $region43: #{tpu_custom_call.1} parent=35 // pred_region
          %s642 = smul.u32 16, %s18
        $region44: #{tpu_custom_call.1} parent=35 // pred_fallthru
          _
      $region36: #{tpu_custom_call.1} parent=5 // pred_fallthru
        _
      %p643 = scmp.le.s32.totalorder 2, %s13
      // Predicated region
      $region45: #{tpu_custom_call.1} parent=5 // pred_check
        %p644 = pneg %p643
      $region46: #{tpu_custom_call.1} parent=5 // pred_check_branch
        %646 = sbr.rel (%p644) target = $region48
      $region47: #{tpu_custom_call.1} parent=5 // pred_region
        %s647 = ssub.s32 %s13, 2
        // Predicated region
        $region49: #{tpu_custom_call.1} parent=47 // pred_check
          %p648 = pneg %p131
        $region50: #{tpu_custom_call.1} parent=47 // pred_check_branch
          %650 = sbr.rel (%p648) target = $region52
        $region51: #{tpu_custom_call.1} parent=47 // pred_region
          %s651 = smul.u32 16, %s19
          %p652 = scmp.lt.s32.totalorder %s651, 63
          %s653 = scalar_select %p652, %s651, 63
          %s654 = smul.addr %s653, 4
          %s655 = scalar_lea.vmem %s4, %s654
        $region52: #{tpu_custom_call.1} parent=47 // pred_fallthru
          _
      $region48: #{tpu_custom_call.1} parent=5 // pred_fallthru
        _
    $region6: #{tpu_custom_call.1} parent=1 // loop_footer
      %s17 = sadd.s32 1, %s13
    $region7: #{tpu_custom_call.1} parent=1 // loop_footer_branch
      %12 = sbr.rel target = $region3
    $region8: #{tpu_custom_call.1} parent=1 // loop_exit
      _
    %656 = vsyncpa [#allocation3], 1
    %s657 = scalar_lea.sflag [#allocation3], 1
    %658 = vsyncpa %s657, 1

</llo_original>
